<compile_context>
chip_gen: v5e
topology: v5e:2x2
jax: 0.10.0
libtpu: 0.0.40
codegen_flags: <defaults>
</compile_context>

<pallas_src>
import functools

import jax
import jax.numpy as jnp
from jax.experimental import pallas as pl
from jax.experimental.pallas import tpu as pltpu


def _round_up(n: int, m: int) -> int:
    return ((n + m - 1) // m) * m


def _mlp(x_ref, w1_ref, b1_ref, w2_ref, b2_ref, w3_ref, b3_ref):
    """Shared 3-layer MLP body on one (TB, in_size) batch tile; f32 accumulation on MXU."""
    h1 = jnp.dot(x_ref[...], w1_ref[...], preferred_element_type=jnp.float32) + b1_ref[...]
    h1 = jnp.maximum(h1, 0.0)
    h2 = jnp.dot(h1, w2_ref[...], preferred_element_type=jnp.float32) + b2_ref[...]
    h2 = jnp.maximum(h2, 0.0)
    return jnp.dot(h2, w3_ref[...], preferred_element_type=jnp.float32) + b3_ref[...]


def qnet_kernel(x_ref, w1_ref, b1_ref, w2_ref, b2_ref, w3_ref, b3_ref, q_ref):
    q_ref[...] = _mlp(x_ref, w1_ref, b1_ref, w2_ref, b2_ref,
                      w3_ref, b3_ref).astype(q_ref.dtype)


def qnet_action_kernel(x_ref, w1_ref, b1_ref, w2_ref, b2_ref, w3_ref, b3_ref,
                       q_ref, a_ref):
    q = _mlp(x_ref, w1_ref, b1_ref, w2_ref, b2_ref, w3_ref, b3_ref)
    q_ref[...] = q.astype(q_ref.dtype)
    # Fused greedy-action argmax over the tiny, static number of Q columns.
    # Strict '>' keeps the first maximal index, matching torch.argmax tie-breaking.
    best_val = q[:, 0:1]
    best_idx = jnp.zeros(best_val.shape, jnp.int32)
    for j in range(1, q.shape[-1]):
        v = q[:, j:j + 1]
        better = v > best_val
        best_val = jnp.where(better, v, best_val)
        best_idx = jnp.where(better, jnp.int32(j), best_idx)
    a_ref[...] = best_idx


def _launch(kernel, x, params, block_batch, with_action):
    w1, b1, w2, b2, w3, b3 = params
    in_size, hidden = w1.shape
    out_size = w3.shape[1]
    B = x.shape[0]

    # Batch tile: multiple of 8 sublanes, big enough to amortize per-step overhead,
    # capped so the grid keeps >= 2 steps (v7x dual-TensorCore sharding) when B allows.
    TB = max(8, min(block_batch, _round_up(-(-B // 2), 8)))
    B_pad = _round_up(B, TB)
    grid = (B_pad // TB,)

    xp = x.astype(jnp.float32)
    if B_pad != B:
        # Batch padding only (rows are independent); feature dims stay unpadded.
        xp = jnp.pad(xp, ((0, B_pad - B), (0, 0)))

    resident = lambda i: (0, 0)  # weights/biases: same block every step -> VMEM resident
    in_specs = [
        pl.BlockSpec((TB, in_size), lambda i: (i, 0)),   # x: tiled over batch, pipelined
        pl.BlockSpec((in_size, hidden), resident),
        pl.BlockSpec((1, hidden), resident),
        pl.BlockSpec((hidden, hidden), resident),
        pl.BlockSpec((1, hidden), resident),
        pl.BlockSpec((hidden, out_size), resident),
        pl.BlockSpec((1, out_size), resident),
    ]

    q_shape = jax.ShapeDtypeStruct((B_pad, out_size), jnp.float32)
    q_spec = pl.BlockSpec((TB, out_size), lambda i: (i, 0))
    if with_action:
        out_shape = (q_shape, jax.ShapeDtypeStruct((B_pad, 1), jnp.int32))
        out_specs = (q_spec, pl.BlockSpec((TB, 1), lambda i: (i, 0)))
    else:
        out_shape = q_shape
        out_specs = q_spec

    return pl.pallas_call(
        kernel,
        out_shape=out_shape,
        grid=grid,
        in_specs=in_specs,
        out_specs=out_specs,
        compiler_params=pltpu.CompilerParams(
            dimension_semantics=("parallel",),  # batch axis shards across TensorCores
        ),
    )(xp, w1, b1, w2, b2, w3, b3)


@functools.partial(jax.jit, static_argnames=("block_batch",))
def qnet_forward(x, params, *, block_batch: int = 2048):
    """Forward pass matching the PyTorch QNet module: returns (B, output_size) Q-values."""
    out = _launch(qnet_kernel, x, params, block_batch, with_action=False)
    return out[:x.shape[0]]


@functools.partial(jax.jit, static_argnames=("block_batch",))
def qnet_forward_with_action(x, params, *, block_batch: int = 2048):
    """RL inference path: Q-values plus in-kernel greedy action per row (int32)."""
    q, a = _launch(qnet_action_kernel, x, params, block_batch, with_action=True)
    B = x.shape[0]
    return q[:B], a[:B, 0]


def params_from_torch_layout(torch_params):
    """Convert PyTorch nn.Linear params (W: [out, in], b: [out]) to kernel layout ONCE,
    outside the training/inference loop, so no per-call layout/pad ops remain."""
    (w1, b1), (w2, b2), (w3, b3) = torch_params

    def cvt(w, b):
        w = jnp.asarray(w, jnp.float32).T                # [in, out]
        b = jnp.asarray(b, jnp.float32).reshape(1, -1)   # [1, out]
        return w, b

    w1, b1 = cvt(w1, b1)
    w2, b2 = cvt(w2, b2)
    w3, b3 = cvt(w3, b3)
    return (w1, b1, w2, b2, w3, b3)


def init_qnet_params(key, input_size, hidden_size, output_size):
    """Deterministic init mimicking PyTorch nn.Linear (uniform +/- 1/sqrt(fan_in)),
    produced directly in kernel layout (W: [in, out], b: [1, out])."""
    keys = jax.random.split(key, 6)

    def linear(kw, kb, fan_in, fan_out):
        bound = 1.0 / jnp.sqrt(float(fan_in))
        w = jax.random.uniform(kw, (fan_in, fan_out), jnp.float32, -bound, bound)
        b = jax.random.uniform(kb, (1, fan_out), jnp.float32, -bound, bound)
        return w, b

    w1, b1 = linear(keys[0], keys[1], input_size, hidden_size)
    w2, b2 = linear(keys[2], keys[3], hidden_size, hidden_size)
    w3, b3 = linear(keys[4], keys[5], hidden_size, output_size)
    return (w1, b1, w2, b2, w3, b3)


def qnet_reference(x, params):
    """Pure-JAX reference of the same forward pass."""
    w1, b1, w2, b2, w3, b3 = params
    h1 = jnp.maximum(x @ w1 + b1, 0.0)
    h2 = jnp.maximum(h1 @ w2 + b2, 0.0)
    return h2 @ w3 + b3


if __name__ == "__main__":
    # CartPole-style QNet shapes: state=4 -> hidden=32 -> 2 Q-values.
    input_size, hidden_size, output_size = 4, 32, 2

    key = jax.random.PRNGKey(0)
    pkey, xkey1, xkey2 = jax.random.split(key, 3)
    params = init_qnet_params(pkey, input_size, hidden_size, output_size)

    # Test 1: tiny batch (single grid step).
    x_small = jax.random.normal(xkey1, (8, input_size), jnp.float32)
    out_small = jax.block_until_ready(qnet_forward(x_small, params))
    ref_small = qnet_reference(x_small, params)
    assert out_small.shape == (8, output_size)
    assert jnp.allclose(out_small, ref_small, atol=1e-5, rtol=1e-5), "mismatch (small batch)"

    # Test 2: larger, non-tile-aligned batch (batch padding + two parallel grid steps).
    x_big = jax.random.normal(xkey2, (1000, input_size), jnp.float32)
    out_big = jax.block_until_ready(qnet_forward(x_big, params))
    ref_big = qnet_reference(x_big, params)
    assert out_big.shape == (1000, output_size)
    assert jnp.allclose(out_big, ref_big, atol=1e-5, rtol=1e-5), "mismatch (large batch)"

    # Test 3: fused in-kernel greedy-action argmax path.
    q_a, act = qnet_forward_with_action(x_big, params)
    q_a, act = jax.block_until_ready((q_a, act))
    assert q_a.shape == (1000, output_size) and act.shape == (1000,)
    assert jnp.allclose(q_a, ref_big, atol=1e-5, rtol=1e-5), "mismatch (action path Q)"
    assert jnp.array_equal(act, jnp.argmax(q_a, axis=-1).astype(jnp.int32)), "mismatch (action)"

    print("KERNEL_OK")
</pallas_src>

<mosaic_0001>
module attributes {stable_mosaic.version = 11 : i64} {
  func.func @qnet_kernel(%arg0: i32, %arg1: memref<8x4xf32, #tpu.memory_space<vmem>>, %arg2: memref<4x32xf32, #tpu.memory_space<vmem>>, %arg3: memref<1x32xf32, #tpu.memory_space<vmem>>, %arg4: memref<32x32xf32, #tpu.memory_space<vmem>>, %arg5: memref<1x32xf32, #tpu.memory_space<vmem>>, %arg6: memref<32x2xf32, #tpu.memory_space<vmem>>, %arg7: memref<1x2xf32, #tpu.memory_space<vmem>>, %arg8: memref<8x2xf32, #tpu.memory_space<vmem>>) attributes {dimension_semantics = [#tpu.dimension_semantics<parallel>], iteration_bounds = array<i64: 1>, scalar_prefetch = 0 : i64, scratch_operands = 0 : i64, tpu.core_type = #tpu.core_type<tc>, window_params = [{transform_indices = @transform_0, window_bounds = array<i64: 8, 4>}, {pipeline_mode = #tpu.pipeline_mode<synchronous>, transform_indices = @transform_1, window_bounds = array<i64: 4, 32>}, {pipeline_mode = #tpu.pipeline_mode<synchronous>, transform_indices = @transform_2, window_bounds = array<i64: 1, 32>}, {pipeline_mode = #tpu.pipeline_mode<synchronous>, transform_indices = @transform_3, window_bounds = array<i64: 32, 32>}, {pipeline_mode = #tpu.pipeline_mode<synchronous>, transform_indices = @transform_4, window_bounds = array<i64: 1, 32>}, {pipeline_mode = #tpu.pipeline_mode<synchronous>, transform_indices = @transform_5, window_bounds = array<i64: 32, 2>}, {pipeline_mode = #tpu.pipeline_mode<synchronous>, transform_indices = @transform_6, window_bounds = array<i64: 1, 2>}, {transform_indices = @transform_7, window_bounds = array<i64: 8, 2>}]} {
    %c0 = arith.constant 0 : index
    %c0_0 = arith.constant 0 : index
    %0 = vector.load %arg1[%c0, %c0_0] : memref<8x4xf32, #tpu.memory_space<vmem>>, vector<8x4xf32>
    %c0_1 = arith.constant 0 : index
    %c0_2 = arith.constant 0 : index
    %1 = vector.load %arg2[%c0_1, %c0_2] : memref<4x32xf32, #tpu.memory_space<vmem>>, vector<4x32xf32>
    %cst = arith.constant dense<0.000000e+00> : vector<8x32xf32>
    %2 = tpu.matmul %0, %1, %cst {dimension_numbers = #tpu.dot_dimension_numbers<[1], [0], [0], [1], [0, 0, 1, 1], [], []>} : vector<8x4xf32>, vector<4x32xf32>, vector<8x32xf32> -> vector<8x32xf32>
    %c0_3 = arith.constant 0 : index
    %c0_4 = arith.constant 0 : index
    %3 = vector.load %arg3[%c0_3, %c0_4] : memref<1x32xf32, #tpu.memory_space<vmem>>, vector<1x32xf32>
    %4 = vector.broadcast %3 : vector<1x32xf32> to vector<8x32xf32>
    %5 = arith.addf %2, %4 : vector<8x32xf32>
    %cst_5 = arith.constant 0.000000e+00 : f32
    %6 = vector.broadcast %cst_5 : f32 to vector<8x32xf32>
    %7 = arith.maximumf %5, %6 : vector<8x32xf32>
    %c0_6 = arith.constant 0 : index
    %c0_7 = arith.constant 0 : index
    %8 = vector.load %arg4[%c0_6, %c0_7] : memref<32x32xf32, #tpu.memory_space<vmem>>, vector<32x32xf32>
    %cst_8 = arith.constant dense<0.000000e+00> : vector<8x32xf32>
    %9 = tpu.matmul %7, %8, %cst_8 {dimension_numbers = #tpu.dot_dimension_numbers<[1], [0], [0], [1], [0, 0, 1, 1], [], []>} : vector<8x32xf32>, vector<32x32xf32>, vector<8x32xf32> -> vector<8x32xf32>
    %c0_9 = arith.constant 0 : index
    %c0_10 = arith.constant 0 : index
    %10 = vector.load %arg5[%c0_9, %c0_10] : memref<1x32xf32, #tpu.memory_space<vmem>>, vector<1x32xf32>
    %11 = vector.broadcast %10 : vector<1x32xf32> to vector<8x32xf32>
    %12 = arith.addf %9, %11 : vector<8x32xf32>
    %cst_11 = arith.constant 0.000000e+00 : f32
    %13 = vector.broadcast %cst_11 : f32 to vector<8x32xf32>
    %14 = arith.maximumf %12, %13 : vector<8x32xf32>
    %c0_12 = arith.constant 0 : index
    %c0_13 = arith.constant 0 : index
    %15 = vector.load %arg6[%c0_12, %c0_13] : memref<32x2xf32, #tpu.memory_space<vmem>>, vector<32x2xf32>
    %cst_14 = arith.constant dense<0.000000e+00> : vector<8x2xf32>
    %16 = tpu.matmul %14, %15, %cst_14 {dimension_numbers = #tpu.dot_dimension_numbers<[1], [0], [0], [1], [0, 0, 1, 1], [], []>} : vector<8x32xf32>, vector<32x2xf32>, vector<8x2xf32> -> vector<8x2xf32>
    %c0_15 = arith.constant 0 : index
    %c0_16 = arith.constant 0 : index
    %17 = vector.load %arg7[%c0_15, %c0_16] : memref<1x2xf32, #tpu.memory_space<vmem>>, vector<1x2xf32>
    %18 = vector.broadcast %17 : vector<1x2xf32> to vector<8x2xf32>
    %19 = arith.addf %16, %18 : vector<8x2xf32>
    %c0_17 = arith.constant 0 : index
    %c0_18 = arith.constant 0 : index
    %20 = vector.load %arg8[%c0_17, %c0_18] : memref<8x2xf32, #tpu.memory_space<vmem>>, vector<8x2xf32>
    tpu.vector_store %arg8[%c0_17, %c0_18], %19 {strides = array<i32>} : memref<8x2xf32, #tpu.memory_space<vmem>>, vector<8x2xf32>,
    return
  }
  func.func @transform_0(%arg0: i32) -> (i32, i32) {
    %c0_i32 = arith.constant 0 : i32
    %c0_i32_0 = arith.constant 0 : i32
    return %arg0, %c0_i32 : i32, i32
  }
  func.func @transform_1(%arg0: i32) -> (i32, i32) {
    %c0_i32 = arith.constant 0 : i32
    %c0_i32_0 = arith.constant 0 : i32
    %c0_i32_1 = arith.constant 0 : i32
    return %c0_i32, %c0_i32_0 : i32, i32
  }
  func.func @transform_2(%arg0: i32) -> (i32, i32) {
    %c0_i32 = arith.constant 0 : i32
    %c0_i32_0 = arith.constant 0 : i32
    %c0_i32_1 = arith.constant 0 : i32
    return %c0_i32, %c0_i32_0 : i32, i32
  }
  func.func @transform_3(%arg0: i32) -> (i32, i32) {
    %c0_i32 = arith.constant 0 : i32
    %c0_i32_0 = arith.constant 0 : i32
    %c0_i32_1 = arith.constant 0 : i32
    return %c0_i32, %c0_i32_0 : i32, i32
  }
  func.func @transform_4(%arg0: i32) -> (i32, i32) {
    %c0_i32 = arith.constant 0 : i32
    %c0_i32_0 = arith.constant 0 : i32
    %c0_i32_1 = arith.constant 0 : i32
    return %c0_i32, %c0_i32_0 : i32, i32
  }
  func.func @transform_5(%arg0: i32) -> (i32, i32) {
    %c0_i32 = arith.constant 0 : i32
    %c0_i32_0 = arith.constant 0 : i32
    %c0_i32_1 = arith.constant 0 : i32
    return %c0_i32, %c0_i32_0 : i32, i32
  }
  func.func @transform_6(%arg0: i32) -> (i32, i32) {
    %c0_i32 = arith.constant 0 : i32
    %c0_i32_0 = arith.constant 0 : i32
    %c0_i32_1 = arith.constant 0 : i32
    return %c0_i32, %c0_i32_0 : i32, i32
  }
  func.func @transform_7(%arg0: i32) -> (i32, i32) {
    %c0_i32 = arith.constant 0 : i32
    %c0_i32_0 = arith.constant 0 : i32
    return %arg0, %c0_i32 : i32, i32
  }
}

</mosaic_0001>

<llo_original>
// kernel: qnet_forward.1
$region0: #{qnet_forward.1}
  #allocation0 [shape = 'u32[]', space=smem, size = 0x4, offset = 0x4, fixed_abs, tag = 'smem constant byte address 0x4 - core index']
  #allocation1 [shape = 'u32[72,128]{1,0:T(1,128)}', space=vmem, size = 0x9000, scoped, tag = 'internal scratch']
  %s0 = inlined_call_operand.vmem [shape: f32[8,4], index: 0, kind: input, shape index: {}]
  %s1 = inlined_call_operand.vmem [shape: f32[4,32], index: 1, kind: input, shape index: {}]
  %s2 = inlined_call_operand.vmem [shape: f32[1,32], index: 2, kind: input, shape index: {}]
  %s3 = inlined_call_operand.vmem [shape: f32[32,32], index: 3, kind: input, shape index: {}]
  %s4 = inlined_call_operand.vmem [shape: f32[1,32], index: 4, kind: input, shape index: {}]
  %s5 = inlined_call_operand.vmem [shape: f32[32,2], index: 5, kind: input, shape index: {}]
  %s6 = inlined_call_operand.vmem [shape: f32[1,2], index: 6, kind: input, shape index: {}]
  %s7 = inlined_call_operand.vmem [shape: f32[8,2], index: 7, kind: output, shape index: {}]
  %s8 = sld [smem:[#allocation0]]
  $region38: #{qnet_forward.1} parent=0
    _
  %s10 = ssub.s32 1, %s8
  %s11 = scalar_select 0, %s10, %s8
  // Predicated region
  $region2: #{qnet_forward.1} parent=0 // pred_check
    _
  $region3: #{qnet_forward.1} parent=0 // pred_check_branch
    %13 = sbr.rel (0) target = $region5
  $region4: #{qnet_forward.1} parent=0 // pred_region
    _
  $region5: #{qnet_forward.1} parent=0 // pred_fallthru
    _
  // Predicated region
  $region6: #{qnet_forward.1} parent=0 // pred_check
    _
  $region7: #{qnet_forward.1} parent=0 // pred_check_branch
    %15 = sbr.rel (0) target = $region9
  $region8: #{qnet_forward.1} parent=0 // pred_region
    _
  $region9: #{qnet_forward.1} parent=0 // pred_fallthru
    _
  // Predicated region
  $region10: #{qnet_forward.1} parent=0 // pred_check
    _
  $region11: #{qnet_forward.1} parent=0 // pred_check_branch
    %17 = sbr.rel (0) target = $region13
  $region12: #{qnet_forward.1} parent=0 // pred_region
    _
  $region13: #{qnet_forward.1} parent=0 // pred_fallthru
    _
  // Predicated region
  $region14: #{qnet_forward.1} parent=0 // pred_check
    _
  $region15: #{qnet_forward.1} parent=0 // pred_check_branch
    %19 = sbr.rel (0) target = $region17
  $region16: #{qnet_forward.1} parent=0 // pred_region
    _
  $region17: #{qnet_forward.1} parent=0 // pred_fallthru
    _
  // Predicated region
  $region18: #{qnet_forward.1} parent=0 // pred_check
    _
  $region19: #{qnet_forward.1} parent=0 // pred_check_branch
    %21 = sbr.rel (0) target = $region21
  $region20: #{qnet_forward.1} parent=0 // pred_region
    _
  $region21: #{qnet_forward.1} parent=0 // pred_fallthru
    _
  // Predicated region
  $region22: #{qnet_forward.1} parent=0 // pred_check
    _
  $region23: #{qnet_forward.1} parent=0 // pred_check_branch
    %23 = sbr.rel (0) target = $region25
  $region24: #{qnet_forward.1} parent=0 // pred_region
    _
  $region25: #{qnet_forward.1} parent=0 // pred_fallthru
    _
  // Predicated region
  $region26: #{qnet_forward.1} parent=0 // pred_check
    _
  $region27: #{qnet_forward.1} parent=0 // pred_check_branch
    %25 = sbr.rel (0) target = $region29
  $region28: #{qnet_forward.1} parent=0 // pred_region
    _
  $region29: #{qnet_forward.1} parent=0 // pred_fallthru
    _
  %v26 = vld [vmem:[%s0] sm:$0xff]
  %v27 = vld [vmem:[%s1] sm:$0xf]
  %v28 = vld [vmem:[%s2] sm:$0x1]
  %v30 = vperm.slane %v28, 0
  %vm32 = vcmask 31744
  %v34 = vsel %vm32, %v26, 0
  %vm36 = vcmask 1043456
  %v38 = vsel %vm36, %v27, 0
  %40 = vmatpush.msra.mxu0 0.0
  %41 = vmatpush.msra.mxu0 0.0
  %42 = vmatpush.msra.mxu0 0.0
  %43 = vmatpush.msra.mxu0 0.0
  %44 = vmatpush.msra.mxu0 0.0
  %45 = vmatpush.msra.mxu0 0.0
  %46 = vmatpush.msra.mxu0 0.0
  %47 = vmatpush.msra.mxu0 0.0
  %48 = vmatpush.msra.mxu0 0.0
  %49 = vmatpush.msra.mxu0 0.0
  %50 = vmatpush.msra.mxu0 0.0
  %51 = vmatpush.msra.mxu0 0.0
  %52 = vmatpush.msra.mxu0 0.0
  %53 = vmatpush.msra.mxu0 0.0
  %54 = vmatpush.msra.mxu0 0.0
  %55 = vmatpush.msra.mxu0 %v38
  %56 = vmatmul.f32.gmra.mxu0 %v34
  %v57 = vpop.f32.mrf.mxu0
  %v58 = vadd.f32 %v30, %v57
  %59 = vdwg.mxu0
  %v60 = vmax.f32 %v58, 0.0
  %v61 = vld [vmem:[%s3] sm:$0xff]
  %v62 = vld [vmem:[%s3 + $0x8] sm:$0xff]
  %v63 = vld [vmem:[%s3 + $0x10] sm:$0xff]
  %v64 = vld [vmem:[%s3 + $0x18] sm:$0xff]
  %v65 = vld [vmem:[%s4] sm:$0x1]
  %v67 = vperm.slane %v65, 0
  %vm69 = vcmask 261120
  %v71 = vsel %vm69, %v60, 0
  %73 = vmatpush.msra.mxu0 0.0
  %74 = vmatpush.msra.mxu0 0.0
  %75 = vmatpush.msra.mxu0 0.0
  %76 = vmatpush.msra.mxu0 0.0
  %77 = vmatpush.msra.mxu0 0.0
  %78 = vmatpush.msra.mxu0 0.0
  %79 = vmatpush.msra.mxu0 0.0
  %80 = vmatpush.msra.mxu0 0.0
  %81 = vmatpush.msra.mxu0 0.0
  %82 = vmatpush.msra.mxu0 0.0
  %83 = vmatpush.msra.mxu0 0.0
  %84 = vmatpush.msra.mxu0 0.0
  %85 = vmatpush.msra.mxu0 %v64
  %86 = vmatpush.msra.mxu0 %v63
  %87 = vmatpush.msra.mxu0 %v62
  %88 = vmatpush.msra.mxu0 %v61
  %89 = vmatmul.f32.gmra.mxu0 %v71
  %v90 = vpop.f32.mrf.mxu0
  %v91 = vadd.f32 %v67, %v90
  %92 = vdwg.mxu0
  %v93 = vmax.f32 %v91, 0.0
  %v94 = vld [vmem:[%s5] sm:$0xff]
  %v95 = vld [vmem:[%s5 + $0x8] sm:$0xff]
  %v96 = vld [vmem:[%s5 + $0x10] sm:$0xff]
  %v97 = vld [vmem:[%s5 + $0x18] sm:$0xff]
  %v98 = vld [vmem:[%s6] sm:$0x1]
  %v100 = vperm.slane %v98, 0
  %v103 = vsel %vm69, %v93, 0
  %105 = vmatpush.msra.mxu0 0.0
  %106 = vmatpush.msra.mxu0 0.0
  %107 = vmatpush.msra.mxu0 0.0
  %108 = vmatpush.msra.mxu0 0.0
  %109 = vmatpush.msra.mxu0 0.0
  %110 = vmatpush.msra.mxu0 0.0
  %111 = vmatpush.msra.mxu0 0.0
  %112 = vmatpush.msra.mxu0 0.0
  %113 = vmatpush.msra.mxu0 0.0
  %114 = vmatpush.msra.mxu0 0.0
  %115 = vmatpush.msra.mxu0 0.0
  %116 = vmatpush.msra.mxu0 0.0
  %117 = vmatpush.msra.mxu0 %v97
  %118 = vmatpush.msra.mxu0 %v96
  %119 = vmatpush.msra.mxu0 %v95
  %120 = vmatpush.msra.mxu0 %v94
  %121 = vmatmul.f32.gmra.mxu0 %v103
  %v122 = vpop.f32.mrf.mxu0
  %v123 = vadd.f32 %v100, %v122
  %124 = vdwg.mxu0
  %vm125 = vcmask 15360
  %126 = vst.msk [vmem:[%s7] sm:$0xff] %vm125, %v123
  // Predicated region
  $region30: #{qnet_forward.1} parent=0 // pred_check
    _
  $region31: #{qnet_forward.1} parent=0 // pred_check_branch
    %128 = sbr.rel (0) target = $region33
  $region32: #{qnet_forward.1} parent=0 // pred_region
    _
  $region33: #{qnet_forward.1} parent=0 // pred_fallthru
    _
  // Predicated region
  $region34: #{qnet_forward.1} parent=0 // pred_check
    _
  $region35: #{qnet_forward.1} parent=0 // pred_check_branch
    %130 = sbr.rel (0) target = $region37
  $region36: #{qnet_forward.1} parent=0 // pred_region
    _
  $region37: #{qnet_forward.1} parent=0 // pred_fallthru
    _

</llo_original>
